<compile_context>
chip_gen: v6e
topology: v6e:2x2x1
jax: 0.10.0
libtpu: 0.0.40
codegen_flags: <defaults>
</compile_context>

<pallas_src>
import jax
import jax.numpy as jnp
from jax.experimental import pallas as pl
from jax.experimental.pallas import tpu as pltpu

INPUT_SIZE = 28 * 28
HIDDEN_SIZES = [40, 20]
OUTPUT_SIZE = 10

# Batch tile: big enough to sit on the HBM-roofline plateau and amortize per-step
# overhead, small enough that the double-buffered padded x tile (~14 MiB f32) plus
# weights/out/temporaries fits the explicit 32 MiB scoped-VMEM budget on every chip.
TILE_B = 2048
VMEM_LIMIT_BYTES = 32 * 1024 * 1024


def _mlp_kernel(x_ref, w1_ref, b1_ref, w2_ref, b2_ref, w3_ref, b3_ref, o_ref):
    # Cast on-chip: HBM traffic stays at the caller's input dtype (f32/bf16/uint8).
    x = x_ref[...].astype(jnp.float32)
    # fc1 + ReLU
    h1 = jnp.dot(x, w1_ref[...], preferred_element_type=jnp.float32) + b1_ref[...]
    h1 = jnp.maximum(h1, 0.0)
    # fc2 + ReLU
    h2 = jnp.dot(h1, w2_ref[...], preferred_element_type=jnp.float32) + b2_ref[...]
    h2 = jnp.maximum(h2, 0.0)
    # fc3 + LogSoftmax(dim=1), max-subtracted for stability
    logits = jnp.dot(h2, w3_ref[...], preferred_element_type=jnp.float32) + b3_ref[...]
    m = jnp.max(logits, axis=1, keepdims=True)
    shifted = logits - m
    lse = jnp.log(jnp.sum(jnp.exp(shifted), axis=1, keepdims=True))
    # 10-wide masked stores: ~1% of HBM traffic, accepted knowingly (do NOT pad to 128).
    o_ref[...] = (shifted - lse).astype(o_ref.dtype)


@jax.jit
def my_network_forward(x, params):
    """Forward pass of MyNetwork.

    x: any shape that flattens to (-1, 784), e.g. (B, 1, 28, 28) NCHW; any real dtype
       (f32 / bf16 / uint8) -- the f32 cast happens inside the kernel, so feeding
       narrower dtypes directly cuts the dominant HBM read 2-4x.
    params: dict with w1 (784,40), b1 (1,40), w2 (40,20), b2 (1,20),
            w3 (20,10), b3 (1,10)  -- weights already transposed to (in, out).
    """
    x2d = x.reshape(-1, INPUT_SIZE)  # glue: x.view(-1, 784); free metadata reshape
    B = x2d.shape[0]

    if B <= TILE_B:
        tb = B                        # single tile; block == full array dims
        b_pad = B
    else:
        tb = TILE_B                   # multiple of 8 -> sublane-aligned
        b_pad = pl.cdiv(B, tb) * tb
        if b_pad != B:
            x2d = jnp.pad(x2d, ((0, b_pad - B), (0, 0)))

    grid = (b_pad // tb,)
    # Constant index_map -> weight/bias blocks are not re-fetched across the batch grid.
    resident = lambda shape: pl.BlockSpec(shape, lambda i: (0, 0))

    # Advisory cost estimate so XLA can schedule neighbouring ops around the custom call.
    flops = 2 * b_pad * (INPUT_SIZE * HIDDEN_SIZES[0]
                         + HIDDEN_SIZES[0] * HIDDEN_SIZES[1]
                         + HIDDEN_SIZES[1] * OUTPUT_SIZE)
    transcendentals = b_pad * (OUTPUT_SIZE + 1)        # exp per class + log per row
    param_bytes = 4 * (INPUT_SIZE * HIDDEN_SIZES[0] + HIDDEN_SIZES[0]
                       + HIDDEN_SIZES[0] * HIDDEN_SIZES[1] + HIDDEN_SIZES[1]
                       + HIDDEN_SIZES[1] * OUTPUT_SIZE + OUTPUT_SIZE)
    bytes_accessed = (b_pad * INPUT_SIZE * x2d.dtype.itemsize
                      + param_bytes
                      + b_pad * OUTPUT_SIZE * 4)

    out = pl.pallas_call(
        _mlp_kernel,
        out_shape=jax.ShapeDtypeStruct((b_pad, OUTPUT_SIZE), jnp.float32),
        grid=grid,
        in_specs=[
            pl.BlockSpec((tb, INPUT_SIZE), lambda i: (i, 0)),   # streamed activations
            resident((INPUT_SIZE, HIDDEN_SIZES[0])),
            resident((1, HIDDEN_SIZES[0])),
            resident((HIDDEN_SIZES[0], HIDDEN_SIZES[1])),
            resident((1, HIDDEN_SIZES[1])),
            resident((HIDDEN_SIZES[1], OUTPUT_SIZE)),
            resident((1, OUTPUT_SIZE)),
        ],
        out_specs=pl.BlockSpec((tb, OUTPUT_SIZE), lambda i: (i, 0)),
        compiler_params=pltpu.CompilerParams(
            # Shards batch tiles across TCs on v7x; measured no-op on v5e/v6e.
            dimension_semantics=("parallel",),
            # Explicit budget: ~14 MiB double-buffered x + <1 MiB weights + out/temps.
            # Fits v7x's 64 MiB physical VMEM; overrides v5e's 16 MiB scoped default.
            vmem_limit_bytes=VMEM_LIMIT_BYTES,
        ),
        cost_estimate=pl.CostEstimate(
            flops=int(flops),
            transcendentals=int(transcendentals),
            bytes_accessed=int(bytes_accessed),
        ),
    )(
        x2d,
        params["w1"], params["b1"],
        params["w2"], params["b2"],
        params["w3"], params["b3"],
    )
    return out[:B] if b_pad != B else out


def init_params(key):
    """Deterministic init mimicking nn.Linear's U(-1/sqrt(in), 1/sqrt(in))."""
    dims = [INPUT_SIZE] + HIDDEN_SIZES + [OUTPUT_SIZE]
    params = {}
    keys = jax.random.split(key, 2 * (len(dims) - 1))
    for i, (fan_in, fan_out) in enumerate(zip(dims[:-1], dims[1:])):
        bound = 1.0 / (fan_in ** 0.5)
        # stored pre-transposed: (in, out)
        params[f"w{i+1}"] = jax.random.uniform(
            keys[2 * i], (fan_in, fan_out), jnp.float32, -bound, bound)
        params[f"b{i+1}"] = jax.random.uniform(
            keys[2 * i + 1], (1, fan_out), jnp.float32, -bound, bound)
    return params


def _reference(x, params):
    x2d = x.reshape(-1, INPUT_SIZE).astype(jnp.float32)
    h1 = jnp.maximum(x2d @ params["w1"] + params["b1"], 0.0)
    h2 = jnp.maximum(h1 @ params["w2"] + params["b2"], 0.0)
    return jax.nn.log_softmax(h2 @ params["w3"] + params["b3"], axis=1)


if __name__ == "__main__":
    key = jax.random.PRNGKey(0)
    k_param, k_x1, k_x2 = jax.random.split(key, 3)
    params = init_params(k_param)

    # Small MNIST-like batch: NCHW (2, 1, 28, 28) f32; forward flattens to (2, 784).
    x_small = jax.random.normal(k_x1, (2, 1, 28, 28), dtype=jnp.float32)
    out_small = my_network_forward(x_small, params)
    jax.block_until_ready(out_small)
    assert out_small.shape == (2, OUTPUT_SIZE)
    assert jnp.allclose(out_small, _reference(x_small, params), atol=1e-5, rtol=1e-5)

    # Larger, non-multiple batch in bf16: exercises the batch-tiled grid, the padding
    # path, and the narrow-input-dtype contract (2x less HBM read than f32).
    x_big = jax.random.normal(k_x2, (2500, 1, 28, 28), dtype=jnp.float32).astype(jnp.bfloat16)
    out_big = my_network_forward(x_big, params)
    jax.block_until_ready(out_big)
    assert out_big.shape == (2500, OUTPUT_SIZE)
    assert jnp.allclose(out_big, _reference(x_big, params), atol=1e-5, rtol=1e-5)

    print("KERNEL_OK")
</pallas_src>

<mosaic_0001>
module attributes {stable_mosaic.version = 11 : i64} {
  func.func @_mlp_kernel(%arg0: i32, %arg1: memref<2x784xf32, #tpu.memory_space<vmem>>, %arg2: memref<784x40xf32, #tpu.memory_space<vmem>>, %arg3: memref<1x40xf32, #tpu.memory_space<vmem>>, %arg4: memref<40x20xf32, #tpu.memory_space<vmem>>, %arg5: memref<1x20xf32, #tpu.memory_space<vmem>>, %arg6: memref<20x10xf32, #tpu.memory_space<vmem>>, %arg7: memref<1x10xf32, #tpu.memory_space<vmem>>, %arg8: memref<2x10xf32, #tpu.memory_space<vmem>>) attributes {dimension_semantics = [#tpu.dimension_semantics<parallel>], iteration_bounds = array<i64: 1>, scalar_prefetch = 0 : i64, scratch_operands = 0 : i64, tpu.core_type = #tpu.core_type<tc>, window_params = [{transform_indices = @transform_0, window_bounds = array<i64: 2, 784>}, {pipeline_mode = #tpu.pipeline_mode<synchronous>, transform_indices = @transform_1, window_bounds = array<i64: 784, 40>}, {pipeline_mode = #tpu.pipeline_mode<synchronous>, transform_indices = @transform_2, window_bounds = array<i64: 1, 40>}, {pipeline_mode = #tpu.pipeline_mode<synchronous>, transform_indices = @transform_3, window_bounds = array<i64: 40, 20>}, {pipeline_mode = #tpu.pipeline_mode<synchronous>, transform_indices = @transform_4, window_bounds = array<i64: 1, 20>}, {pipeline_mode = #tpu.pipeline_mode<synchronous>, transform_indices = @transform_5, window_bounds = array<i64: 20, 10>}, {pipeline_mode = #tpu.pipeline_mode<synchronous>, transform_indices = @transform_6, window_bounds = array<i64: 1, 10>}, {transform_indices = @transform_7, window_bounds = array<i64: 2, 10>}]} {
    %c0 = arith.constant 0 : index
    %c0_0 = arith.constant 0 : index
    %0 = vector.load %arg1[%c0, %c0_0] : memref<2x784xf32, #tpu.memory_space<vmem>>, vector<2x784xf32>
    %c0_1 = arith.constant 0 : index
    %c0_2 = arith.constant 0 : index
    %1 = vector.load %arg2[%c0_1, %c0_2] : memref<784x40xf32, #tpu.memory_space<vmem>>, vector<784x40xf32>
    %cst = arith.constant dense<0.000000e+00> : vector<2x40xf32>
    %2 = tpu.matmul %0, %1, %cst {dimension_numbers = #tpu.dot_dimension_numbers<[1], [0], [0], [1], [0, 0, 1, 1], [], []>} : vector<2x784xf32>, vector<784x40xf32>, vector<2x40xf32> -> vector<2x40xf32>
    %c0_3 = arith.constant 0 : index
    %c0_4 = arith.constant 0 : index
    %3 = vector.load %arg3[%c0_3, %c0_4] : memref<1x40xf32, #tpu.memory_space<vmem>>, vector<1x40xf32>
    %4 = vector.broadcast %3 : vector<1x40xf32> to vector<2x40xf32>
    %5 = arith.addf %2, %4 : vector<2x40xf32>
    %cst_5 = arith.constant 0.000000e+00 : f32
    %6 = vector.broadcast %cst_5 : f32 to vector<2x40xf32>
    %7 = arith.maximumf %5, %6 : vector<2x40xf32>
    %c0_6 = arith.constant 0 : index
    %c0_7 = arith.constant 0 : index
    %8 = vector.load %arg4[%c0_6, %c0_7] : memref<40x20xf32, #tpu.memory_space<vmem>>, vector<40x20xf32>
    %cst_8 = arith.constant dense<0.000000e+00> : vector<2x20xf32>
    %9 = tpu.matmul %7, %8, %cst_8 {dimension_numbers = #tpu.dot_dimension_numbers<[1], [0], [0], [1], [0, 0, 1, 1], [], []>} : vector<2x40xf32>, vector<40x20xf32>, vector<2x20xf32> -> vector<2x20xf32>
    %c0_9 = arith.constant 0 : index
    %c0_10 = arith.constant 0 : index
    %10 = vector.load %arg5[%c0_9, %c0_10] : memref<1x20xf32, #tpu.memory_space<vmem>>, vector<1x20xf32>
    %11 = vector.broadcast %10 : vector<1x20xf32> to vector<2x20xf32>
    %12 = arith.addf %9, %11 : vector<2x20xf32>
    %cst_11 = arith.constant 0.000000e+00 : f32
    %13 = vector.broadcast %cst_11 : f32 to vector<2x20xf32>
    %14 = arith.maximumf %12, %13 : vector<2x20xf32>
    %c0_12 = arith.constant 0 : index
    %c0_13 = arith.constant 0 : index
    %15 = vector.load %arg6[%c0_12, %c0_13] : memref<20x10xf32, #tpu.memory_space<vmem>>, vector<20x10xf32>
    %cst_14 = arith.constant dense<0.000000e+00> : vector<2x10xf32>
    %16 = tpu.matmul %14, %15, %cst_14 {dimension_numbers = #tpu.dot_dimension_numbers<[1], [0], [0], [1], [0, 0, 1, 1], [], []>} : vector<2x20xf32>, vector<20x10xf32>, vector<2x10xf32> -> vector<2x10xf32>
    %c0_15 = arith.constant 0 : index
    %c0_16 = arith.constant 0 : index
    %17 = vector.load %arg7[%c0_15, %c0_16] : memref<1x10xf32, #tpu.memory_space<vmem>>, vector<1x10xf32>
    %18 = vector.broadcast %17 : vector<1x10xf32> to vector<2x10xf32>
    %19 = arith.addf %16, %18 : vector<2x10xf32>
    %cst_17 = arith.constant dense<0xFF800000> : vector<2xf32>
    %20 = vector.multi_reduction <maximumf>, %19, %cst_17 [1] : vector<2x10xf32> to vector<2xf32>
    %21 = vector.shape_cast %20 : vector<2xf32> to vector<2x1xf32>
    %22 = vector.broadcast %21 : vector<2x1xf32> to vector<2x10xf32>
    %23 = arith.subf %19, %22 : vector<2x10xf32>
    %24 = math.exp %23 : vector<2x10xf32>
    %cst_18 = arith.constant dense<0.000000e+00> : vector<2xf32>
    %25 = vector.multi_reduction <add>, %24, %cst_18 [1] : vector<2x10xf32> to vector<2xf32>
    %26 = vector.shape_cast %25 : vector<2xf32> to vector<2x1xf32>
    %27 = math.log %26 : vector<2x1xf32>
    %28 = vector.broadcast %27 : vector<2x1xf32> to vector<2x10xf32>
    %29 = arith.subf %23, %28 : vector<2x10xf32>
    %c0_19 = arith.constant 0 : index
    %c0_20 = arith.constant 0 : index
    %30 = vector.load %arg8[%c0_19, %c0_20] : memref<2x10xf32, #tpu.memory_space<vmem>>, vector<2x10xf32>
    tpu.vector_store %arg8[%c0_19, %c0_20], %29 {strides = array<i32>} : memref<2x10xf32, #tpu.memory_space<vmem>>, vector<2x10xf32>,
    return
  }
  func.func @transform_0(%arg0: i32) -> (i32, i32) {
    %c0_i32 = arith.constant 0 : i32
    %c0_i32_0 = arith.constant 0 : i32
    return %arg0, %c0_i32 : i32, i32
  }
  func.func @transform_1(%arg0: i32) -> (i32, i32) {
    %c0_i32 = arith.constant 0 : i32
    %c0_i32_0 = arith.constant 0 : i32
    %c0_i32_1 = arith.constant 0 : i32
    return %c0_i32, %c0_i32_0 : i32, i32
  }
  func.func @transform_2(%arg0: i32) -> (i32, i32) {
    %c0_i32 = arith.constant 0 : i32
    %c0_i32_0 = arith.constant 0 : i32
    %c0_i32_1 = arith.constant 0 : i32
    return %c0_i32, %c0_i32_0 : i32, i32
  }
  func.func @transform_3(%arg0: i32) -> (i32, i32) {
    %c0_i32 = arith.constant 0 : i32
    %c0_i32_0 = arith.constant 0 : i32
    %c0_i32_1 = arith.constant 0 : i32
    return %c0_i32, %c0_i32_0 : i32, i32
  }
  func.func @transform_4(%arg0: i32) -> (i32, i32) {
    %c0_i32 = arith.constant 0 : i32
    %c0_i32_0 = arith.constant 0 : i32
    %c0_i32_1 = arith.constant 0 : i32
    return %c0_i32, %c0_i32_0 : i32, i32
  }
  func.func @transform_5(%arg0: i32) -> (i32, i32) {
    %c0_i32 = arith.constant 0 : i32
    %c0_i32_0 = arith.constant 0 : i32
    %c0_i32_1 = arith.constant 0 : i32
    return %c0_i32, %c0_i32_0 : i32, i32
  }
  func.func @transform_6(%arg0: i32) -> (i32, i32) {
    %c0_i32 = arith.constant 0 : i32
    %c0_i32_0 = arith.constant 0 : i32
    %c0_i32_1 = arith.constant 0 : i32
    return %c0_i32, %c0_i32_0 : i32, i32
  }
  func.func @transform_7(%arg0: i32) -> (i32, i32) {
    %c0_i32 = arith.constant 0 : i32
    %c0_i32_0 = arith.constant 0 : i32
    return %arg0, %c0_i32 : i32, i32
  }
}

</mosaic_0001>

<llo_original>
// kernel: my_network_forward.1
$region0: #{my_network_forward.1}
  #allocation0 [shape = 'u32[]', space=smem, size = 0x4, offset = 0x4, fixed_abs, tag = 'smem constant byte address 0x4 - core index']
  #allocation1 [shape = 'u32[144,128]{1,0:T(1,128)}', space=vmem, size = 0x12000, scoped, tag = 'internal scratch']
  %s0 = inlined_call_operand.vmem [shape: f32[2,784], index: 0, kind: input, shape index: {}]
  %s1 = inlined_call_operand.vmem [shape: f32[784,40], index: 1, kind: input, shape index: {}]
  %s2 = inlined_call_operand.vmem [shape: f32[1,40], index: 2, kind: input, shape index: {}]
  %s3 = inlined_call_operand.vmem [shape: f32[40,20], index: 3, kind: input, shape index: {}]
  %s4 = inlined_call_operand.vmem [shape: f32[1,20], index: 4, kind: input, shape index: {}]
  %s5 = inlined_call_operand.vmem [shape: f32[20,10], index: 5, kind: input, shape index: {}]
  %s6 = inlined_call_operand.vmem [shape: f32[1,10], index: 6, kind: input, shape index: {}]
  %s7 = inlined_call_operand.hbm [shape: f32[2,10], index: 7, kind: output, shape index: {}]
  %s8 = sld [smem:[#allocation0]]
  $region38: #{my_network_forward.1} parent=0
    _
  %s10 = ssub.s32 1, %s8
  %s11 = scalar_select 0, %s10, %s8
  $region1: #{my_network_forward.1} parent=0
    #allocation2 [shape = 'u8[1024]{0}', space=vmem, size = 0x400, scoped, tag = 'output window, operand 0, single buffered']
    #allocation3 [shape = 's32[1]{0}', space=sflag, size = 0x4, scoped, tag = 'scoped memory for my_network_forward.1']
    %12 = vsyncpa [#allocation3], 0
    // Predicated region
    $region2: #{my_network_forward.1} parent=1 // pred_check
      _
    $region3: #{my_network_forward.1} parent=1 // pred_check_branch
      %14 = sbr.rel (0) target = $region5
    $region4: #{my_network_forward.1} parent=1 // pred_region
      _
    $region5: #{my_network_forward.1} parent=1 // pred_fallthru
      _
    // Predicated region
    $region6: #{my_network_forward.1} parent=1 // pred_check
      _
    $region7: #{my_network_forward.1} parent=1 // pred_check_branch
      %16 = sbr.rel (0) target = $region9
    $region8: #{my_network_forward.1} parent=1 // pred_region
      _
    $region9: #{my_network_forward.1} parent=1 // pred_fallthru
      _
    // Predicated region
    $region10: #{my_network_forward.1} parent=1 // pred_check
      _
    $region11: #{my_network_forward.1} parent=1 // pred_check_branch
      %18 = sbr.rel (0) target = $region13
    $region12: #{my_network_forward.1} parent=1 // pred_region
      _
    $region13: #{my_network_forward.1} parent=1 // pred_fallthru
      _
    // Predicated region
    $region14: #{my_network_forward.1} parent=1 // pred_check
      _
    $region15: #{my_network_forward.1} parent=1 // pred_check_branch
      %20 = sbr.rel (0) target = $region17
    $region16: #{my_network_forward.1} parent=1 // pred_region
      _
    $region17: #{my_network_forward.1} parent=1 // pred_fallthru
      _
    // Predicated region
    $region18: #{my_network_forward.1} parent=1 // pred_check
      _
    $region19: #{my_network_forward.1} parent=1 // pred_check_branch
      %22 = sbr.rel (0) target = $region21
    $region20: #{my_network_forward.1} parent=1 // pred_region
      _
    $region21: #{my_network_forward.1} parent=1 // pred_fallthru
      _
    // Predicated region
    $region22: #{my_network_forward.1} parent=1 // pred_check
      _
    $region23: #{my_network_forward.1} parent=1 // pred_check_branch
      %24 = sbr.rel (0) target = $region25
    $region24: #{my_network_forward.1} parent=1 // pred_region
      _
    $region25: #{my_network_forward.1} parent=1 // pred_fallthru
      _
    // Predicated region
    $region26: #{my_network_forward.1} parent=1 // pred_check
      _
    $region27: #{my_network_forward.1} parent=1 // pred_check_branch
      %26 = sbr.rel (0) target = $region29
    $region28: #{my_network_forward.1} parent=1 // pred_region
      _
    $region29: #{my_network_forward.1} parent=1 // pred_fallthru
      _
    %v27 = vld [vmem:[%s0] sm:$0xff]
    %v28 = vld [vmem:[%s0 + $0x8] sm:$0x3f]
    %v29 = vld [vmem:[%s1] sm:$0xff]
    %v30 = vld [vmem:[%s1 + $0x8] sm:$0xff]
    %v31 = vld [vmem:[%s1 + $0x10] sm:$0xff]
    %v32 = vld [vmem:[%s1 + $0x18] sm:$0xff]
    %v33 = vld [vmem:[%s1 + $0x20] sm:$0xff]
    %v34 = vld [vmem:[%s1 + $0x28] sm:$0xff]
    %v35 = vld [vmem:[%s1 + $0x30] sm:$0xff]
    %v36 = vld [vmem:[%s1 + $0x38] sm:$0xff]
    %v37 = vld [vmem:[%s1 + $0x40] sm:$0xff]
    %v38 = vld [vmem:[%s1 + $0x48] sm:$0xff]
    %v39 = vld [vmem:[%s1 + $0x50] sm:$0xff]
    %v40 = vld [vmem:[%s1 + $0x58] sm:$0xff]
    %v41 = vld [vmem:[%s1 + $0x60] sm:$0xff]
    %v42 = vld [vmem:[%s1 + $0x68] sm:$0xff]
    %v43 = vld [vmem:[%s1 + $0x70] sm:$0xff]
    %v44 = vld [vmem:[%s1 + $0x78] sm:$0xff]
    %v45 = vld [vmem:[%s1 + $0x80] sm:$0xff]
    %v46 = vld [vmem:[%s1 + $0x88] sm:$0xff]
    %v47 = vld [vmem:[%s1 + $0x90] sm:$0xff]
    %v48 = vld [vmem:[%s1 + $0x98] sm:$0xff]
    %v49 = vld [vmem:[%s1 + $0xa0] sm:$0xff]
    %v50 = vld [vmem:[%s1 + $0xa8] sm:$0xff]
    %v51 = vld [vmem:[%s1 + $0xb0] sm:$0xff]
    %v52 = vld [vmem:[%s1 + $0xb8] sm:$0xff]
    %v53 = vld [vmem:[%s1 + $0xc0] sm:$0xff]
    %v54 = vld [vmem:[%s1 + $0xc8] sm:$0xff]
    %v55 = vld [vmem:[%s1 + $0xd0] sm:$0xff]
    %v56 = vld [vmem:[%s1 + $0xd8] sm:$0xff]
    %v57 = vld [vmem:[%s1 + $0xe0] sm:$0xff]
    %v58 = vld [vmem:[%s1 + $0xe8] sm:$0xff]
    %v59 = vld [vmem:[%s1 + $0xf0] sm:$0xff]
    %v60 = vld [vmem:[%s1 + $0xf8] sm:$0xff]
    %v61 = vld [vmem:[%s1 + $0x100] sm:$0xff]
    %v62 = vld [vmem:[%s1 + $0x108] sm:$0xff]
    %v63 = vld [vmem:[%s1 + $0x110] sm:$0xff]
    %v64 = vld [vmem:[%s1 + $0x118] sm:$0xff]
    %v65 = vld [vmem:[%s1 + $0x120] sm:$0xff]
    %v66 = vld [vmem:[%s1 + $0x128] sm:$0xff]
    %v67 = vld [vmem:[%s1 + $0x130] sm:$0xff]
    %v68 = vld [vmem:[%s1 + $0x138] sm:$0xff]
    %v69 = vld [vmem:[%s1 + $0x140] sm:$0xff]
    %v70 = vld [vmem:[%s1 + $0x148] sm:$0xff]
    %v71 = vld [vmem:[%s1 + $0x150] sm:$0xff]
    %v72 = vld [vmem:[%s1 + $0x158] sm:$0xff]
    %v73 = vld [vmem:[%s1 + $0x160] sm:$0xff]
    %v74 = vld [vmem:[%s1 + $0x168] sm:$0xff]
    %v75 = vld [vmem:[%s1 + $0x170] sm:$0xff]
    %v76 = vld [vmem:[%s1 + $0x178] sm:$0xff]
    %v77 = vld [vmem:[%s1 + $0x180] sm:$0xff]
    %v78 = vld [vmem:[%s1 + $0x188] sm:$0xff]
    %v79 = vld [vmem:[%s1 + $0x190] sm:$0xff]
    %v80 = vld [vmem:[%s1 + $0x198] sm:$0xff]
    %v81 = vld [vmem:[%s1 + $0x1a0] sm:$0xff]
    %v82 = vld [vmem:[%s1 + $0x1a8] sm:$0xff]
    %v83 = vld [vmem:[%s1 + $0x1b0] sm:$0xff]
    %v84 = vld [vmem:[%s1 + $0x1b8] sm:$0xff]
    %v85 = vld [vmem:[%s1 + $0x1c0] sm:$0xff]
    %v86 = vld [vmem:[%s1 + $0x1c8] sm:$0xff]
    %v87 = vld [vmem:[%s1 + $0x1d0] sm:$0xff]
    %v88 = vld [vmem:[%s1 + $0x1d8] sm:$0xff]
    %v89 = vld [vmem:[%s1 + $0x1e0] sm:$0xff]
    %v90 = vld [vmem:[%s1 + $0x1e8] sm:$0xff]
    %v91 = vld [vmem:[%s1 + $0x1f0] sm:$0xff]
    %v92 = vld [vmem:[%s1 + $0x1f8] sm:$0xff]
    %v93 = vld [vmem:[%s1 + $0x200] sm:$0xff]
    %v94 = vld [vmem:[%s1 + $0x208] sm:$0xff]
    %v95 = vld [vmem:[%s1 + $0x210] sm:$0xff]
    %v96 = vld [vmem:[%s1 + $0x218] sm:$0xff]
    %v97 = vld [vmem:[%s1 + $0x220] sm:$0xff]
    %v98 = vld [vmem:[%s1 + $0x228] sm:$0xff]
    %v99 = vld [vmem:[%s1 + $0x230] sm:$0xff]
    %v100 = vld [vmem:[%s1 + $0x238] sm:$0xff]
    %v101 = vld [vmem:[%s1 + $0x240] sm:$0xff]
    %v102 = vld [vmem:[%s1 + $0x248] sm:$0xff]
    %v103 = vld [vmem:[%s1 + $0x250] sm:$0xff]
    %v104 = vld [vmem:[%s1 + $0x258] sm:$0xff]
    %v105 = vld [vmem:[%s1 + $0x260] sm:$0xff]
    %v106 = vld [vmem:[%s1 + $0x268] sm:$0xff]
    %v107 = vld [vmem:[%s1 + $0x270] sm:$0xff]
    %v108 = vld [vmem:[%s1 + $0x278] sm:$0xff]
    %v109 = vld [vmem:[%s1 + $0x280] sm:$0xff]
    %v110 = vld [vmem:[%s1 + $0x288] sm:$0xff]
    %v111 = vld [vmem:[%s1 + $0x290] sm:$0xff]
    %v112 = vld [vmem:[%s1 + $0x298] sm:$0xff]
    %v113 = vld [vmem:[%s1 + $0x2a0] sm:$0xff]
    %v114 = vld [vmem:[%s1 + $0x2a8] sm:$0xff]
    %v115 = vld [vmem:[%s1 + $0x2b0] sm:$0xff]
    %v116 = vld [vmem:[%s1 + $0x2b8] sm:$0xff]
    %v117 = vld [vmem:[%s1 + $0x2c0] sm:$0xff]
    %v118 = vld [vmem:[%s1 + $0x2c8] sm:$0xff]
    %v119 = vld [vmem:[%s1 + $0x2d0] sm:$0xff]
    %v120 = vld [vmem:[%s1 + $0x2d8] sm:$0xff]
    %v121 = vld [vmem:[%s1 + $0x2e0] sm:$0xff]
    %v122 = vld [vmem:[%s1 + $0x2e8] sm:$0xff]
    %v123 = vld [vmem:[%s1 + $0x2f0] sm:$0xff]
    %v124 = vld [vmem:[%s1 + $0x2f8] sm:$0xff]
    %v125 = vld [vmem:[%s1 + $0x300] sm:$0xff]
    %v126 = vld [vmem:[%s1 + $0x308] sm:$0xff]
    %v127 = vld [vmem:[%s2] sm:$0x1]
    %v129 = vlaneseq
    %v130 = vshrl.u32 %v129, 7
    %v131 = vsub.s32 0, %v130
    %v132 = vrot.slane %v127, %v131
    %v136 = vcombine.high %v27, %v27
    %v138 = vunpack.c.l.s4 1983009808
    %v139 = vunpack.c.0.s8 %v138
    %v140 = vlaneseq
    %v141 = vshrl.u32 %v140, 7
    %v142 = vsub.s32 %v139, %v141
    %v143 = vrot.slane %v27, %v142
    %v145 = vunpack.c.l.s4 1983009808
    %v146 = vunpack.c.0.s8 %v145
    %v147 = vlaneseq
    %v148 = vshrl.u32 %v147, 7
    %v149 = vsub.s32 %v146, %v148
    %v150 = vrot.slane %v136, %v149
    %v151 = vcombine.high %v143, %v143
    %v152 = vcombine.high %v150, %v150
    %v153 = vcombine.high %v28, %v28
    %v155 = vunpack.c.l.s4 1983009808
    %v156 = vunpack.c.0.s8 %v155
    %v157 = vlaneseq
    %v158 = vshrl.u32 %v157, 7
    %v159 = vsub.s32 %v156, %v158
    %v160 = vrot.slane %v28, %v159
    %v162 = vunpack.c.l.s4 1983009808
    %v163 = vunpack.c.0.s8 %v162
    %v164 = vlaneseq
    %v165 = vshrl.u32 %v164, 7
    %v166 = vsub.s32 %v163, %v165
    %v167 = vrot.slane %v153, %v166
    %v168 = vcombine.high %v160, %v160
    %vm175 = vcmask 130048
    %v176 = vsel %vm175, %v167, 0
    %178 = vmatprep.subr.mxu0 0.0
    %179 = vmatpush1.msra.mxu0 %v44
    %180 = vmatprep.subr.mxu0 0.0
    %181 = vmatpush1.msra.mxu0 %v43
    %182 = vmatprep.subr.mxu0 0.0
    %183 = vmatpush1.msra.mxu0 %v42
    %184 = vmatprep.subr.mxu0 0.0
    %185 = vmatpush1.msra.mxu0 %v41
    %186 = vmatprep.subr.mxu0 0.0
    %187 = vmatpush1.msra.mxu0 %v40
    %188 = vmatprep.subr.mxu0 0.0
    %189 = vmatpush1.msra.mxu0 %v39
    %190 = vmatprep.subr.mxu0 0.0
    %191 = vmatpush1.msra.mxu0 %v38
    %192 = vmatprep.subr.mxu0 0.0
    %193 = vmatpush1.msra.mxu0 %v37
    %194 = vmatprep.subr.mxu0 0.0
    %195 = vmatpush1.msra.mxu0 %v36
    %196 = vmatprep.subr.mxu0 0.0
    %197 = vmatpush1.msra.mxu0 %v35
    %198 = vmatprep.subr.mxu0 0.0
    %199 = vmatpush1.msra.mxu0 %v34
    %200 = vmatprep.subr.mxu0 0.0
    %201 = vmatpush1.msra.mxu0 %v33
    %202 = vmatprep.subr.mxu0 0.0
    %203 = vmatpush1.msra.mxu0 %v32
    %204 = vmatprep.subr.mxu0 0.0
    %205 = vmatpush1.msra.mxu0 %v31
    %206 = vmatprep.subr.mxu0 0.0
    %207 = vmatpush1.msra.mxu0 %v30
    %208 = vmatprep.subr.mxu0 0.0
    %209 = vmatpush1.msra.mxu0 %v29
    %210 = vmatprep.subr.mxu0 0.0
    %211 = vmatpush2.msra.mxu0 %v60
    %212 = vmatprep.subr.mxu0 0.0
    %213 = vmatpush2.msra.mxu0 %v59
    %214 = vmatprep.subr.mxu0 0.0
    %215 = vmatpush2.msra.mxu0 %v58
    %216 = vmatprep.subr.mxu0 0.0
    %217 = vmatpush2.msra.mxu0 %v57
    %218 = vmatprep.subr.mxu0 0.0
    %219 = vmatpush2.msra.mxu0 %v56
    %220 = vmatprep.subr.mxu0 0.0
    %221 = vmatpush2.msra.mxu0 %v55
    %222 = vmatprep.subr.mxu0 0.0
    %223 = vmatpush2.msra.mxu0 %v54
    %224 = vmatprep.subr.mxu0 0.0
    %225 = vmatpush2.msra.mxu0 %v53
    %226 = vmatprep.subr.mxu0 0.0
    %227 = vmatpush2.msra.mxu0 %v52
    %228 = vmatprep.subr.mxu0 0.0
    %229 = vmatpush2.msra.mxu0 %v51
    %230 = vmatprep.subr.mxu0 0.0
    %231 = vmatpush2.msra.mxu0 %v50
    %232 = vmatprep.subr.mxu0 0.0
    %233 = vmatpush2.msra.mxu0 %v49
    %234 = vmatprep.subr.mxu0 0.0
    %235 = vmatpush2.msra.mxu0 %v48
    %236 = vmatprep.subr.mxu0 0.0
    %237 = vmatpush2.msra.mxu0 %v47
    %238 = vmatprep.subr.mxu0 0.0
    %239 = vmatpush2.msra.mxu0 %v46
    %240 = vmatprep.subr.mxu0 0.0
    %241 = vmatpush2.msra.mxu0 %v45
    %242 = vmatprep.mubr.f32.mxu0 %v151
    %243 = vmatmul.mubr.f32.gmra.mxu0 %v143
    %v244 = vpop.f32.mrf.mxu0
    %v245 = vadd.f32 %v132, %v244
    %v246 = vpop.f32.mrf.mxu0
    %247 = vdwg.mxu0
    %248 = vmatprep.subr.mxu0 0.0
    %249 = vmatpush1.msra.mxu0 %v76
    %250 = vmatprep.subr.mxu0 0.0
    %251 = vmatpush1.msra.mxu0 %v75
    %252 = vmatprep.subr.mxu0 0.0
    %253 = vmatpush1.msra.mxu0 %v74
    %254 = vmatprep.subr.mxu0 0.0
    %255 = vmatpush1.msra.mxu0 %v73
    %256 = vmatprep.subr.mxu0 0.0
    %257 = vmatpush1.msra.mxu0 %v72
    %258 = vmatprep.subr.mxu0 0.0
    %259 = vmatpush1.msra.mxu0 %v71
    %260 = vmatprep.subr.mxu0 0.0
    %261 = vmatpush1.msra.mxu0 %v70
    %262 = vmatprep.subr.mxu0 0.0
    %263 = vmatpush1.msra.mxu0 %v69
    %264 = vmatprep.subr.mxu0 0.0
    %265 = vmatpush1.msra.mxu0 %v68
    %266 = vmatprep.subr.mxu0 0.0
    %267 = vmatpush1.msra.mxu0 %v67
    %268 = vmatprep.subr.mxu0 0.0
    %269 = vmatpush1.msra.mxu0 %v66
    %270 = vmatprep.subr.mxu0 0.0
    %271 = vmatpush1.msra.mxu0 %v65
    %272 = vmatprep.subr.mxu0 0.0
    %273 = vmatpush1.msra.mxu0 %v64
    %274 = vmatprep.subr.mxu0 0.0
    %275 = vmatpush1.msra.mxu0 %v63
    %276 = vmatprep.subr.mxu0 0.0
    %277 = vmatpush1.msra.mxu0 %v62
    %278 = vmatprep.subr.mxu0 0.0
    %279 = vmatpush1.msra.mxu0 %v61
    %280 = vmatprep.subr.mxu0 0.0
    %281 = vmatpush2.msra.mxu0 %v92
    %282 = vmatprep.subr.mxu0 0.0
    %283 = vmatpush2.msra.mxu0 %v91
    %284 = vmatprep.subr.mxu0 0.0
    %285 = vmatpush2.msra.mxu0 %v90
    %286 = vmatprep.subr.mxu0 0.0
    %287 = vmatpush2.msra.mxu0 %v89
    %288 = vmatprep.subr.mxu0 0.0
    %289 = vmatpush2.msra.mxu0 %v88
    %290 = vmatprep.subr.mxu0 0.0
    %291 = vmatpush2.msra.mxu0 %v87
    %292 = vmatprep.subr.mxu0 0.0
    %293 = vmatpush2.msra.mxu0 %v86
    %294 = vmatprep.subr.mxu0 0.0
    %295 = vmatpush2.msra.mxu0 %v85
    %296 = vmatprep.subr.mxu0 0.0
    %297 = vmatpush2.msra.mxu0 %v84
    %298 = vmatprep.subr.mxu0 0.0
    %299 = vmatpush2.msra.mxu0 %v83
    %300 = vmatprep.subr.mxu0 0.0
    %301 = vmatpush2.msra.mxu0 %v82
    %302 = vmatprep.subr.mxu0 0.0
    %303 = vmatpush2.msra.mxu0 %v81
    %304 = vmatprep.subr.mxu0 0.0
    %305 = vmatpush2.msra.mxu0 %v80
    %306 = vmatprep.subr.mxu0 0.0
    %307 = vmatpush2.msra.mxu0 %v79
    %308 = vmatprep.subr.mxu0 0.0
    %309 = vmatpush2.msra.mxu0 %v78
    %310 = vmatprep.subr.mxu0 0.0
    %311 = vmatpush2.msra.mxu0 %v77
    %312 = vmatprep.mubr.f32.mxu0 %v152
    %313 = vmatmul.mubr.f32.gmra.mxu0 %v150
    %v314 = vpop.f32.mrf.mxu0
    %v315 = vadd.f32 %v245, %v314
    %v316 = vpop.f32.mrf.mxu0
    %317 = vdwg.mxu0
    %318 = vmatprep.subr.mxu0 0.0
    %319 = vmatpush1.msra.mxu0 %v108
    %320 = vmatprep.subr.mxu0 0.0
    %321 = vmatpush1.msra.mxu0 %v107
    %322 = vmatprep.subr.mxu0 0.0
    %323 = vmatpush1.msra.mxu0 %v106
    %324 = vmatprep.subr.mxu0 0.0
    %325 = vmatpush1.msra.mxu0 %v105
    %326 = vmatprep.subr.mxu0 0.0
    %327 = vmatpush1.msra.mxu0 %v104
    %328 = vmatprep.subr.mxu0 0.0
    %329 = vmatpush1.msra.mxu0 %v103
    %330 = vmatprep.subr.mxu0 0.0
    %331 = vmatpush1.msra.mxu0 %v102
    %332 = vmatprep.subr.mxu0 0.0
    %333 = vmatpush1.msra.mxu0 %v101
    %334 = vmatprep.subr.mxu0 0.0
    %335 = vmatpush1.msra.mxu0 %v100
    %336 = vmatprep.subr.mxu0 0.0
    %337 = vmatpush1.msra.mxu0 %v99
    %338 = vmatprep.subr.mxu0 0.0
    %339 = vmatpush1.msra.mxu0 %v98
    %340 = vmatprep.subr.mxu0 0.0
    %341 = vmatpush1.msra.mxu0 %v97
    %342 = vmatprep.subr.mxu0 0.0
    %343 = vmatpush1.msra.mxu0 %v96
    %344 = vmatprep.subr.mxu0 0.0
    %345 = vmatpush1.msra.mxu0 %v95
    %346 = vmatprep.subr.mxu0 0.0
    %347 = vmatpush1.msra.mxu0 %v94
    %348 = vmatprep.subr.mxu0 0.0
    %349 = vmatpush1.msra.mxu0 %v93
    %350 = vmatprep.subr.mxu0 0.0
    %351 = vmatpush2.msra.mxu0 %v124
    %352 = vmatprep.subr.mxu0 0.0
    %353 = vmatpush2.msra.mxu0 %v123
    %354 = vmatprep.subr.mxu0 0.0
    %355 = vmatpush2.msra.mxu0 %v122
    %356 = vmatprep.subr.mxu0 0.0
    %357 = vmatpush2.msra.mxu0 %v121
    %358 = vmatprep.subr.mxu0 0.0
    %359 = vmatpush2.msra.mxu0 %v120
    %360 = vmatprep.subr.mxu0 0.0
    %361 = vmatpush2.msra.mxu0 %v119
    %362 = vmatprep.subr.mxu0 0.0
    %363 = vmatpush2.msra.mxu0 %v118
    %364 = vmatprep.subr.mxu0 0.0
    %365 = vmatpush2.msra.mxu0 %v117
    %366 = vmatprep.subr.mxu0 0.0
    %367 = vmatpush2.msra.mxu0 %v116
    %368 = vmatprep.subr.mxu0 0.0
    %369 = vmatpush2.msra.mxu0 %v115
    %370 = vmatprep.subr.mxu0 0.0
    %371 = vmatpush2.msra.mxu0 %v114
    %372 = vmatprep.subr.mxu0 0.0
    %373 = vmatpush2.msra.mxu0 %v113
    %374 = vmatprep.subr.mxu0 0.0
    %375 = vmatpush2.msra.mxu0 %v112
    %376 = vmatprep.subr.mxu0 0.0
    %377 = vmatpush2.msra.mxu0 %v111
    %378 = vmatprep.subr.mxu0 0.0
    %379 = vmatpush2.msra.mxu0 %v110
    %380 = vmatprep.subr.mxu0 0.0
    %381 = vmatpush2.msra.mxu0 %v109
    %382 = vmatprep.mubr.f32.mxu0 %v168
    %383 = vmatmul.mubr.f32.gmra.mxu0 %v160
    %v384 = vpop.f32.mrf.mxu0
    %v385 = vadd.f32 %v315, %v384
    %v386 = vpop.f32.mrf.mxu0
    %387 = vdwg.mxu0
    %388 = vmatprep.subr.mxu0 0.0
    %389 = vmatpush1.msra.mxu0 0.0
    %390 = vmatprep.subr.mxu0 0.0
    %391 = vmatpush1.msra.mxu0 0.0
    %392 = vmatprep.subr.mxu0 0.0
    %393 = vmatpush1.msra.mxu0 0.0
    %394 = vmatprep.subr.mxu0 0.0
    %395 = vmatpush1.msra.mxu0 0.0
    %396 = vmatprep.subr.mxu0 0.0
    %397 = vmatpush1.msra.mxu0 0.0
    %398 = vmatprep.subr.mxu0 0.0
    %399 = vmatpush1.msra.mxu0 0.0
    %400 = vmatprep.subr.mxu0 0.0
    %401 = vmatpush1.msra.mxu0 0.0
    %402 = vmatprep.subr.mxu0 0.0
    %403 = vmatpush1.msra.mxu0 0.0
    %404 = vmatprep.subr.mxu0 0.0
    %405 = vmatpush1.msra.mxu0 0.0
    %406 = vmatprep.subr.mxu0 0.0
    %407 = vmatpush1.msra.mxu0 0.0
    %408 = vmatprep.subr.mxu0 0.0
    %409 = vmatpush1.msra.mxu0 0.0
    %410 = vmatprep.subr.mxu0 0.0
    %411 = vmatpush1.msra.mxu0 0.0
    %412 = vmatprep.subr.mxu0 0.0
    %413 = vmatpush1.msra.mxu0 0.0
    %414 = vmatprep.subr.mxu0 0.0
    %415 = vmatpush1.msra.mxu0 0.0
    %416 = vmatprep.subr.mxu0 0.0
    %417 = vmatpush1.msra.mxu0 %v126
    %418 = vmatprep.subr.mxu0 0.0
    %419 = vmatpush1.msra.mxu0 %v125
    %420 = vmatprep.subr.mxu0 0.0
    %421 = vmatpush2.msra.mxu0 0.0
    %422 = vmatprep.subr.mxu0 0.0
    %423 = vmatpush2.msra.mxu0 0.0
    %424 = vmatprep.subr.mxu0 0.0
    %425 = vmatpush2.msra.mxu0 0.0
    %426 = vmatprep.subr.mxu0 0.0
    %427 = vmatpush2.msra.mxu0 0.0
    %428 = vmatprep.subr.mxu0 0.0
    %429 = vmatpush2.msra.mxu0 0.0
    %430 = vmatprep.subr.mxu0 0.0
    %431 = vmatpush2.msra.mxu0 0.0
    %432 = vmatprep.subr.mxu0 0.0
    %433 = vmatpush2.msra.mxu0 0.0
    %434 = vmatprep.subr.mxu0 0.0
    %435 = vmatpush2.msra.mxu0 0.0
    %436 = vmatprep.subr.mxu0 0.0
    %437 = vmatpush2.msra.mxu0 0.0
    %438 = vmatprep.subr.mxu0 0.0
    %439 = vmatpush2.msra.mxu0 0.0
    %440 = vmatprep.subr.mxu0 0.0
    %441 = vmatpush2.msra.mxu0 0.0
    %442 = vmatprep.subr.mxu0 0.0
    %443 = vmatpush2.msra.mxu0 0.0
    %444 = vmatprep.subr.mxu0 0.0
    %445 = vmatpush2.msra.mxu0 0.0
    %446 = vmatprep.subr.mxu0 0.0
    %447 = vmatpush2.msra.mxu0 0.0
    %448 = vmatprep.subr.mxu0 0.0
    %449 = vmatpush2.msra.mxu0 0.0
    %450 = vmatprep.subr.mxu0 0.0
    %451 = vmatpush2.msra.mxu0 0.0
    %452 = vmatprep.mubr.f32.mxu0 0.0
    %453 = vmatmul.mubr.f32.gmra.mxu0 %v176
    %v454 = vpop.f32.mrf.mxu0
    %v455 = vadd.f32 %v385, %v454
    %v456 = vpop.f32.mrf.mxu0
    %457 = vdwg.mxu0
    %v458 = vmax.f32 %v455, 0.0
    %v459 = vld [vmem:[%s3] sm:$0xff]
    %v460 = vld [vmem:[%s3 + $0x8] sm:$0xff]
    %v461 = vld [vmem:[%s3 + $0x10] sm:$0xff]
    %v462 = vld [vmem:[%s3 + $0x18] sm:$0xff]
    %v463 = vld [vmem:[%s3 + $0x20] sm:$0xff]
    %v464 = vld [vmem:[%s4] sm:$0x1]
    %v466 = vlaneseq
    %v467 = vshrl.u32 %v466, 7
    %v468 = vsub.s32 0, %v467
    %v469 = vrot.slane %v464, %v468
    %vm471 = vcmask 326656
    %v473 = vsel %vm471, %v458, 0
    %475 = vmatprep.subr.mxu0 0.0
    %476 = vmatpush1.msra.mxu0 0.0
    %477 = vmatprep.subr.mxu0 0.0
    %478 = vmatpush1.msra.mxu0 0.0
    %479 = vmatprep.subr.mxu0 0.0
    %480 = vmatpush1.msra.mxu0 0.0
    %481 = vmatprep.subr.mxu0 0.0
    %482 = vmatpush1.msra.mxu0 0.0
    %483 = vmatprep.subr.mxu0 0.0
    %484 = vmatpush1.msra.mxu0 0.0
    %485 = vmatprep.subr.mxu0 0.0
    %486 = vmatpush1.msra.mxu0 0.0
    %487 = vmatprep.subr.mxu0 0.0
    %488 = vmatpush1.msra.mxu0 0.0
    %489 = vmatprep.subr.mxu0 0.0
    %490 = vmatpush1.msra.mxu0 0.0
    %491 = vmatprep.subr.mxu0 0.0
    %492 = vmatpush1.msra.mxu0 0.0
    %493 = vmatprep.subr.mxu0 0.0
    %494 = vmatpush1.msra.mxu0 0.0
    %495 = vmatprep.subr.mxu0 0.0
    %496 = vmatpush1.msra.mxu0 0.0
    %497 = vmatprep.subr.mxu0 0.0
    %498 = vmatpush1.msra.mxu0 %v463
    %499 = vmatprep.subr.mxu0 0.0
    %500 = vmatpush1.msra.mxu0 %v462
    %501 = vmatprep.subr.mxu0 0.0
    %502 = vmatpush1.msra.mxu0 %v461
    %503 = vmatprep.subr.mxu0 0.0
    %504 = vmatpush1.msra.mxu0 %v460
    %505 = vmatprep.subr.mxu0 0.0
    %506 = vmatpush1.msra.mxu0 %v459
    %507 = vmatprep.subr.mxu0 0.0
    %508 = vmatpush2.msra.mxu0 0.0
    %509 = vmatprep.subr.mxu0 0.0
    %510 = vmatpush2.msra.mxu0 0.0
    %511 = vmatprep.subr.mxu0 0.0
    %512 = vmatpush2.msra.mxu0 0.0
    %513 = vmatprep.subr.mxu0 0.0
    %514 = vmatpush2.msra.mxu0 0.0
    %515 = vmatprep.subr.mxu0 0.0
    %516 = vmatpush2.msra.mxu0 0.0
    %517 = vmatprep.subr.mxu0 0.0
    %518 = vmatpush2.msra.mxu0 0.0
    %519 = vmatprep.subr.mxu0 0.0
    %520 = vmatpush2.msra.mxu0 0.0
    %521 = vmatprep.subr.mxu0 0.0
    %522 = vmatpush2.msra.mxu0 0.0
    %523 = vmatprep.subr.mxu0 0.0
    %524 = vmatpush2.msra.mxu0 0.0
    %525 = vmatprep.subr.mxu0 0.0
    %526 = vmatpush2.msra.mxu0 0.0
    %527 = vmatprep.subr.mxu0 0.0
    %528 = vmatpush2.msra.mxu0 0.0
    %529 = vmatprep.subr.mxu0 0.0
    %530 = vmatpush2.msra.mxu0 0.0
    %531 = vmatprep.subr.mxu0 0.0
    %532 = vmatpush2.msra.mxu0 0.0
    %533 = vmatprep.subr.mxu0 0.0
    %534 = vmatpush2.msra.mxu0 0.0
    %535 = vmatprep.subr.mxu0 0.0
    %536 = vmatpush2.msra.mxu0 0.0
    %537 = vmatprep.subr.mxu0 0.0
    %538 = vmatpush2.msra.mxu0 0.0
    %539 = vmatprep.mubr.f32.mxu0 0.0
    %540 = vmatmul.mubr.f32.gmra.mxu0 %v473
    %v541 = vpop.f32.mrf.mxu0
    %v542 = vadd.f32 %v469, %v541
    %v543 = vpop.f32.mrf.mxu0
    %544 = vdwg.mxu0
    %v545 = vmax.f32 %v542, 0.0
    %v546 = vld [vmem:[%s5] sm:$0xff]
    %v547 = vld [vmem:[%s5 + $0x8] sm:$0xff]
    %v548 = vld [vmem:[%s5 + $0x10] sm:$0xf]
    %v549 = vld [vmem:[%s6] sm:$0x1]
    %v551 = vlaneseq
    %v552 = vshrl.u32 %v551, 7
    %v553 = vsub.s32 0, %v552
    %v554 = vrot.slane %v549, %v553
    %vm556 = vcmask 162816
    %v558 = vsel %vm556, %v545, 0
    %vm560 = vcmask 1043456
    %v562 = vsel %vm560, %v548, 0
    %564 = vmatprep.subr.mxu0 0.0
    %565 = vmatpush1.msra.mxu0 0.0
    %566 = vmatprep.subr.mxu0 0.0
    %567 = vmatpush1.msra.mxu0 0.0
    %568 = vmatprep.subr.mxu0 0.0
    %569 = vmatpush1.msra.mxu0 0.0
    %570 = vmatprep.subr.mxu0 0.0
    %571 = vmatpush1.msra.mxu0 0.0
    %572 = vmatprep.subr.mxu0 0.0
    %573 = vmatpush1.msra.mxu0 0.0
    %574 = vmatprep.subr.mxu0 0.0
    %575 = vmatpush1.msra.mxu0 0.0
    %576 = vmatprep.subr.mxu0 0.0
    %577 = vmatpush1.msra.mxu0 0.0
    %578 = vmatprep.subr.mxu0 0.0
    %579 = vmatpush1.msra.mxu0 0.0
    %580 = vmatprep.subr.mxu0 0.0
    %581 = vmatpush1.msra.mxu0 0.0
    %582 = vmatprep.subr.mxu0 0.0
    %583 = vmatpush1.msra.mxu0 0.0
    %584 = vmatprep.subr.mxu0 0.0
    %585 = vmatpush1.msra.mxu0 0.0
    %586 = vmatprep.subr.mxu0 0.0
    %587 = vmatpush1.msra.mxu0 0.0
    %588 = vmatprep.subr.mxu0 0.0
    %589 = vmatpush1.msra.mxu0 0.0
    %590 = vmatprep.subr.mxu0 0.0
    %591 = vmatpush1.msra.mxu0 %v562
    %592 = vmatprep.subr.mxu0 0.0
    %593 = vmatpush1.msra.mxu0 %v547
    %594 = vmatprep.subr.mxu0 0.0
    %595 = vmatpush1.msra.mxu0 %v546
    %596 = vmatprep.subr.mxu0 0.0
    %597 = vmatpush2.msra.mxu0 0.0
    %598 = vmatprep.subr.mxu0 0.0
    %599 = vmatpush2.msra.mxu0 0.0
    %600 = vmatprep.subr.mxu0 0.0
    %601 = vmatpush2.msra.mxu0 0.0
    %602 = vmatprep.subr.mxu0 0.0
    %603 = vmatpush2.msra.mxu0 0.0
    %604 = vmatprep.subr.mxu0 0.0
    %605 = vmatpush2.msra.mxu0 0.0
    %606 = vmatprep.subr.mxu0 0.0
    %607 = vmatpush2.msra.mxu0 0.0
    %608 = vmatprep.subr.mxu0 0.0
    %609 = vmatpush2.msra.mxu0 0.0
    %610 = vmatprep.subr.mxu0 0.0
    %611 = vmatpush2.msra.mxu0 0.0
    %612 = vmatprep.subr.mxu0 0.0
    %613 = vmatpush2.msra.mxu0 0.0
    %614 = vmatprep.subr.mxu0 0.0
    %615 = vmatpush2.msra.mxu0 0.0
    %616 = vmatprep.subr.mxu0 0.0
    %617 = vmatpush2.msra.mxu0 0.0
    %618 = vmatprep.subr.mxu0 0.0
    %619 = vmatpush2.msra.mxu0 0.0
    %620 = vmatprep.subr.mxu0 0.0
    %621 = vmatpush2.msra.mxu0 0.0
    %622 = vmatprep.subr.mxu0 0.0
    %623 = vmatpush2.msra.mxu0 0.0
    %624 = vmatprep.subr.mxu0 0.0
    %625 = vmatpush2.msra.mxu0 0.0
    %626 = vmatprep.subr.mxu0 0.0
    %627 = vmatpush2.msra.mxu0 0.0
    %628 = vmatprep.mubr.f32.mxu0 0.0
    %629 = vmatmul.mubr.f32.gmra.mxu0 %v558
    %v630 = vpop.f32.mrf.mxu0
    %v631 = vadd.f32 %v554, %v630
    %v632 = vpop.f32.mrf.mxu0
    %633 = vdwg.mxu0
    %vm634 = vcmask 74752
    %v635 = vsel %vm634, %v631, -inf
    %636 = vmax.xlane.f32.xlu0 %v635
    %v637 = vpop.xlane.xlu0 %636
    %v638 = vsub.f32 %v631, %v637
    %v639 = vmul.f32 %v638, 1.442695
    %v640 = vpow.pop %v639
    %v641 = vsel %vm634, %v640, 0.0
    %642 = vadd.xlane.f32.xlu0 %v641
    %v643 = vpop.xlane.xlu0 %642
    %v644 = vlog2.pop %v643
    %v645 = vmul.f32 %v644, 0.6931472
    %v646 = vsub.f32 %v638, %v645
    %647 = vst.msk [vmem:[#allocation2] sm:$0x3] %vm634, %v646
    // Predicated region
    $region30: #{my_network_forward.1} parent=1 // pred_check
      _
    $region31: #{my_network_forward.1} parent=1 // pred_check_branch
      %649 = sbr.rel (0) target = $region33
    $region32: #{my_network_forward.1} parent=1 // pred_region
      %s651 = ssub.s32 32, 32
      %652 = vsyncadd [#allocation3], %s651
      %s654 = sshll.u32 [#allocation2], 4
      %s655 = int_to_ptr.vmem [resolvable:$true] %s654
      %657 = dma.vmem_to_hbm [thread:$0]  %s655, 32, %s7, [#allocation3]
    $region33: #{my_network_forward.1} parent=1 // pred_fallthru
      _
    // Predicated region
    $region34: #{my_network_forward.1} parent=1 // pred_check
      _
    $region35: #{my_network_forward.1} parent=1 // pred_check_branch
      %659 = sbr.rel (0) target = $region37
    $region36: #{my_network_forward.1} parent=1 // pred_region
      %660 = dma.done [#allocation3], 32
    $region37: #{my_network_forward.1} parent=1 // pred_fallthru
      _
    %661 = vsyncpa [#allocation3], 1

</llo_original>
